<compile_context>
chip_gen: v7x
topology: tpu7x:2x2x1
jax: 0.10.0
libtpu: 0.0.40
codegen_flags: <defaults>
</compile_context>

<pallas_src>
import jax
import jax.numpy as jnp
from jax.experimental import pallas as pl
from jax.experimental.pallas import tpu as pltpu


_MAX_ROW_TILE = 512  # rows per grid step; multiple of 8 sublanes


# ----------------------------- Pallas kernels --------------------------------
def _si_bias_kernel(x_ref, w_ref, b_ref, o_ref):
    # x_ref: (TM, C_in), w_ref: (C_in, C_out), b_ref: (1, C_out), o_ref: (TM, C_out)
    acc = jnp.dot(x_ref[...], w_ref[...], preferred_element_type=jnp.float32)
    o_ref[...] = (acc + b_ref[...]).astype(o_ref.dtype)


def _si_nobias_kernel(x_ref, w_ref, o_ref):
    acc = jnp.dot(x_ref[...], w_ref[...], preferred_element_type=jnp.float32)
    o_ref[...] = acc.astype(o_ref.dtype)


def _self_interaction_matmul(x2, wT, b2=None):
    """x2: (R, C_in), wT: (C_in, C_out), b2: (1, C_out) or None -> (R, C_out)."""
    R, C_in = x2.shape
    C_out = wT.shape[1]

    # Row tile: full array for small inputs (full-dim block satisfies the
    # (8,128) rule), otherwise a 512-row tile (multiple of 8 sublanes).
    tm = R if R <= _MAX_ROW_TILE else _MAX_ROW_TILE
    grid = (pl.cdiv(R, tm),)

    in_specs = [
        pl.BlockSpec((tm, C_in), lambda i: (i, 0)),      # streamed row tiles
        pl.BlockSpec((C_in, C_out), lambda i: (0, 0)),   # resident weights
    ]
    args = [x2, wT]
    if b2 is not None:
        in_specs.append(pl.BlockSpec((1, C_out), lambda i: (0, 0)))  # resident bias
        args.append(b2)
        kernel = _si_bias_kernel
    else:
        kernel = _si_nobias_kernel

    return pl.pallas_call(
        kernel,
        out_shape=jax.ShapeDtypeStruct((R, C_out), x2.dtype),
        grid=grid,
        in_specs=in_specs,
        out_specs=pl.BlockSpec((tm, C_out), lambda i: (i, 0)),
        compiler_params=pltpu.CompilerParams(
            dimension_semantics=("parallel",),  # independent row tiles -> megacore
        ),
    )(*args)


# ------------------------- module-level wrapper -------------------------------
def self_interaction_layer_with_biases(params, inputs):
    """Forward pass of SelfInteractionLayerWithBiases.

    inputs:  (N, C_in, M) with M = 2L+1
    params:  {"weights": (C_out, C_in), "biases": (C_out,)}  (biases optional)
    returns: (N, C_out, M)   -- identical to the PyTorch forward.
    """
    weights = params["weights"]
    biases = params.get("biases", None)
    N, C_in, M = inputs.shape
    C_out = weights.shape[0]

    # Layout glue: move the tiny spherical axis next to batch and flatten so
    # the kernel's lane (last) dimension is the dense channel axis.
    x2 = jnp.transpose(inputs, (0, 2, 1)).reshape(N * M, C_in)
    wT = jnp.transpose(weights).astype(inputs.dtype)          # (C_in, C_out)
    b2 = None if biases is None else biases.reshape(1, C_out).astype(inputs.dtype)

    out2 = _self_interaction_matmul(x2, wT, b2)               # (N*M, C_out)

    # Rows are (a, i) pairs with g on lanes == einsum 'aig'; permute to module
    # output contract [N, C_out, M].
    return jnp.transpose(out2.reshape(N, M, C_out), (0, 2, 1))


# ----------------------------- parameter init ---------------------------------
def _orthogonal(key, shape):
    rows, cols = shape
    big, small = (rows, cols) if rows >= cols else (cols, rows)
    a = jax.random.normal(key, (big, small), dtype=jnp.float32)
    q, r = jnp.linalg.qr(a)
    q = q * jnp.sign(jnp.diag(r))[None, :]   # sign-fix like torch's orthogonal_
    if rows < cols:
        q = q.T
    return q


def init_self_interaction_params(input_dim, output_dim, key):
    """Mirrors the PyTorch __init__: orthogonal weights, zero biases."""
    return {
        "weights": _orthogonal(key, (output_dim, input_dim)),
        "biases": jnp.zeros((output_dim,), dtype=jnp.float32),
    }


# ------------------------------- reference ------------------------------------
def _reference_forward(params, inputs):
    out = jnp.einsum("afi,gf->aig", inputs, params["weights"])
    if params.get("biases", None) is not None:
        out = out + params["biases"][None, None, :]
    return jnp.transpose(out, (0, 2, 1))


# --------------------------------- demo ---------------------------------------
if __name__ == "__main__":
    key = jax.random.PRNGKey(0)
    kp, kx0, kx1, kx2, kxl = jax.random.split(key, 5)

    input_dim = 32
    output_dim = 32
    params = init_self_interaction_params(input_dim, output_dim, kp)

    checks = []
    # Small inputs, one per angular-momentum channel width M = 2L+1.
    for k, (N, M) in zip((kx0, kx1, kx2), ((2, 1), (2, 3), (2, 5))):
        x = jax.random.normal(k, (N, input_dim, M), dtype=jnp.float32)
        out = self_interaction_layer_with_biases(params, x)
        ref = _reference_forward(params, x)
        checks.append((out, ref, (N, output_dim, M)))

    # A larger batch that exercises the row-tiled grid (R = N*M = 900 > 512,
    # grid of 2 with a partial last tile).
    xl = jax.random.normal(kxl, (300, input_dim, 3), dtype=jnp.float32)
    out_l = self_interaction_layer_with_biases(params, xl)
    ref_l = _reference_forward(params, xl)
    checks.append((out_l, ref_l, (300, output_dim, 3)))

    jax.block_until_ready([c[0] for c in checks])

    for out, ref, shape in checks:
        assert out.shape == shape, (out.shape, shape)
        assert jnp.allclose(out, ref, rtol=1e-5, atol=1e-5)

    print("KERNEL_OK")
</pallas_src>

<mosaic_0001>
module attributes {stable_mosaic.version = 11 : i64} {
  func.func @_si_bias_kernel(%arg0: i32, %arg1: memref<2x32xf32, #tpu.memory_space<vmem>>, %arg2: memref<32x32xf32, #tpu.memory_space<vmem>>, %arg3: memref<1x32xf32, #tpu.memory_space<vmem>>, %arg4: memref<2x32xf32, #tpu.memory_space<vmem>>) attributes {dimension_semantics = [#tpu.dimension_semantics<parallel>], iteration_bounds = array<i64: 1>, scalar_prefetch = 0 : i64, scratch_operands = 0 : i64, tpu.core_type = #tpu.core_type<tc>, window_params = [{transform_indices = @transform_0, window_bounds = array<i64: 2, 32>}, {pipeline_mode = #tpu.pipeline_mode<synchronous>, transform_indices = @transform_1, window_bounds = array<i64: 32, 32>}, {pipeline_mode = #tpu.pipeline_mode<synchronous>, transform_indices = @transform_2, window_bounds = array<i64: 1, 32>}, {transform_indices = @transform_3, window_bounds = array<i64: 2, 32>}]} {
    %c0 = arith.constant 0 : index
    %c0_0 = arith.constant 0 : index
    %0 = vector.load %arg1[%c0, %c0_0] : memref<2x32xf32, #tpu.memory_space<vmem>>, vector<2x32xf32>
    %c0_1 = arith.constant 0 : index
    %c0_2 = arith.constant 0 : index
    %1 = vector.load %arg2[%c0_1, %c0_2] : memref<32x32xf32, #tpu.memory_space<vmem>>, vector<32x32xf32>
    %cst = arith.constant dense<0.000000e+00> : vector<2x32xf32>
    %2 = tpu.matmul %0, %1, %cst {dimension_numbers = #tpu.dot_dimension_numbers<[1], [0], [0], [1], [0, 0, 1, 1], [], []>} : vector<2x32xf32>, vector<32x32xf32>, vector<2x32xf32> -> vector<2x32xf32>
    %c0_3 = arith.constant 0 : index
    %c0_4 = arith.constant 0 : index
    %3 = vector.load %arg3[%c0_3, %c0_4] : memref<1x32xf32, #tpu.memory_space<vmem>>, vector<1x32xf32>
    %4 = vector.broadcast %3 : vector<1x32xf32> to vector<2x32xf32>
    %5 = arith.addf %2, %4 : vector<2x32xf32>
    %c0_5 = arith.constant 0 : index
    %c0_6 = arith.constant 0 : index
    %6 = vector.load %arg4[%c0_5, %c0_6] : memref<2x32xf32, #tpu.memory_space<vmem>>, vector<2x32xf32>
    tpu.vector_store %arg4[%c0_5, %c0_6], %5 {strides = array<i32>} : memref<2x32xf32, #tpu.memory_space<vmem>>, vector<2x32xf32>,
    return
  }
  func.func @transform_0(%arg0: i32) -> (i32, i32) {
    %c0_i32 = arith.constant 0 : i32
    %c0_i32_0 = arith.constant 0 : i32
    return %arg0, %c0_i32 : i32, i32
  }
  func.func @transform_1(%arg0: i32) -> (i32, i32) {
    %c0_i32 = arith.constant 0 : i32
    %c0_i32_0 = arith.constant 0 : i32
    %c0_i32_1 = arith.constant 0 : i32
    return %c0_i32, %c0_i32_0 : i32, i32
  }
  func.func @transform_2(%arg0: i32) -> (i32, i32) {
    %c0_i32 = arith.constant 0 : i32
    %c0_i32_0 = arith.constant 0 : i32
    %c0_i32_1 = arith.constant 0 : i32
    return %c0_i32, %c0_i32_0 : i32, i32
  }
  func.func @transform_3(%arg0: i32) -> (i32, i32) {
    %c0_i32 = arith.constant 0 : i32
    %c0_i32_0 = arith.constant 0 : i32
    return %arg0, %c0_i32 : i32, i32
  }
}

</mosaic_0001>

<llo_original>
// kernel: tpu_custom_call.1
$region0: #{tpu_custom_call.1}
  #allocation0 [shape = 'u32[]', space=smem, size = 0x4, offset = 0x4, fixed_abs, tag = 'smem constant byte address 0x4 - core index']
  #allocation1 [shape = 'u32[144,128]{1,0:T(1,128)}', space=vmem, size = 0x12000, scoped, tag = 'internal scratch']
  %s0 = inlined_call_operand.hbm [shape: f32[2,32], index: 0, kind: input, shape index: {}]
  %s1 = inlined_call_operand.hbm [shape: f32[32,32], index: 1, kind: input, shape index: {}]
  %s2 = inlined_call_operand.vmem [shape: f32[1,32], index: 2, kind: input, shape index: {}]
  %s3 = inlined_call_operand.hbm [shape: f32[2,32], index: 3, kind: output, shape index: {}]
  %s4 = sld [smem:[#allocation0]]
  $region30: #{tpu_custom_call.1} parent=0
    _
  %s6 = ssub.s32 1, %s4
  %s7 = scalar_select 0, %s6, %s4
  $region1: #{tpu_custom_call.1} parent=0
    #allocation2 [shape = 'u8[1024]{0}', space=vmem, size = 0x400, scoped, tag = 'input window, operand 0, single buffered']
    #allocation3 [shape = 's32[1]{0}', space=sflag, size = 0x4, scoped, tag = 'scoped memory for tpu_custom_call.1']
    #allocation4 [shape = 's32[1]{0}', space=sflag, size = 0x4, scoped, tag = 'scoped memory for tpu_custom_call.1']
    #allocation5 [shape = 'u8[16384]{0}', space=vmem, size = 0x4000, scoped, tag = 'input window, operand 1, single buffered']
    #allocation6 [shape = 's32[1]{0}', space=sflag, size = 0x4, scoped, tag = 'scoped memory for tpu_custom_call.1']
    #allocation7 [shape = 'u8[1024]{0}', space=vmem, size = 0x400, scoped, tag = 'output window, operand 0, single buffered']
    %8 = vsyncpa [#allocation3], 0
    %9 = vsyncpa [#allocation6], 0
    %10 = vsyncpa [#allocation4], 0
    // Predicated region
    $region2: #{tpu_custom_call.1} parent=1 // pred_check
      _
    $region3: #{tpu_custom_call.1} parent=1 // pred_check_branch
      %12 = sbr.rel (0) target = $region5
    $region4: #{tpu_custom_call.1} parent=1 // pred_region
      %s14 = ssub.s32 32, 32
      %15 = vsyncadd [#allocation3], %s14
      %s17 = sshll.u32 [#allocation2], 4
      %s18 = int_to_ptr.vmem [resolvable:$true] %s17
      %20 = dma.hbm_to_vmem [thread:$0]  %s0, 32, %s18, [#allocation3]
    $region5: #{tpu_custom_call.1} parent=1 // pred_fallthru
      _
    // Predicated region
    $region6: #{tpu_custom_call.1} parent=1 // pred_check
      _
    $region7: #{tpu_custom_call.1} parent=1 // pred_check_branch
      %22 = sbr.rel (0) target = $region9
    $region8: #{tpu_custom_call.1} parent=1 // pred_region
      %s24 = ssub.s32 512, 512
      %25 = vsyncadd [#allocation6], %s24
      %s26 = sshll.u32 [#allocation5], 4
      %s27 = int_to_ptr.vmem [resolvable:$true] %s26
      %32 = dma.hbm_to_vmem [thread:$0]  %s1, 512, %s27, [#allocation6], 128, 128, 8
    $region9: #{tpu_custom_call.1} parent=1 // pred_fallthru
      _
    // Predicated region
    $region10: #{tpu_custom_call.1} parent=1 // pred_check
      _
    $region11: #{tpu_custom_call.1} parent=1 // pred_check_branch
      %34 = sbr.rel (0) target = $region13
    $region12: #{tpu_custom_call.1} parent=1 // pred_region
      _
    $region13: #{tpu_custom_call.1} parent=1 // pred_fallthru
      _
    // Predicated region
    $region14: #{tpu_custom_call.1} parent=1 // pred_check
      _
    $region15: #{tpu_custom_call.1} parent=1 // pred_check_branch
      %36 = sbr.rel (0) target = $region17
    $region16: #{tpu_custom_call.1} parent=1 // pred_region
      %37 = dma.done [#allocation3], 32
    $region17: #{tpu_custom_call.1} parent=1 // pred_fallthru
      _
    // Predicated region
    $region18: #{tpu_custom_call.1} parent=1 // pred_check
      _
    $region19: #{tpu_custom_call.1} parent=1 // pred_check_branch
      %39 = sbr.rel (0) target = $region21
    $region20: #{tpu_custom_call.1} parent=1 // pred_region
      %40 = dma.done [#allocation6], 512
    $region21: #{tpu_custom_call.1} parent=1 // pred_fallthru
      _
    %v41 = vld [vmem:[#allocation2] sm:$0x3]
    %v42 = vld [vmem:[#allocation5] sm:$0xff]
    %v43 = vld [vmem:[#allocation5 + $0x8] sm:$0xff]
    %v44 = vld [vmem:[#allocation5 + $0x10] sm:$0xff]
    %v45 = vld [vmem:[#allocation5 + $0x18] sm:$0xff]
    %v46 = vld [vmem:[%s2] sm:$0x1]
    %v48 = vlaneseq
    %v49 = vshrl.u32 %v48, 7
    %v50 = vsub.s32 0, %v49
    %v51 = vrot.slane %v46, %v50
    %vm53 = vcmask 261120
    %v55 = vsel %vm53, %v41, 0
    %57 = vmatprep.subr.mxu0 0.0
    %58 = vmatpush1.msra.mxu0 %v42
    %59 = vmatprep.subr.mxu0 0.0
    %60 = vmatpush1.msra.mxu0 %v43
    %61 = vmatprep.subr.mxu0 0.0
    %62 = vmatpush1.msra.mxu0 %v44
    %63 = vmatprep.subr.mxu0 0.0
    %64 = vmatpush1.msra.mxu0 %v45
    %65 = vmatprep.subr.mxu0 0.0
    %66 = vmatpush1.msra.mxu0 0.0
    %67 = vmatprep.subr.mxu0 0.0
    %68 = vmatpush1.msra.mxu0 0.0
    %69 = vmatprep.subr.mxu0 0.0
    %70 = vmatpush1.msra.mxu0 0.0
    %71 = vmatprep.subr.mxu0 0.0
    %72 = vmatpush1.msra.mxu0 0.0
    %73 = vmatprep.subr.mxu0 0.0
    %74 = vmatpush1.msra.mxu0 0.0
    %75 = vmatprep.subr.mxu0 0.0
    %76 = vmatpush1.msra.mxu0 0.0
    %77 = vmatprep.subr.mxu0 0.0
    %78 = vmatpush1.msra.mxu0 0.0
    %79 = vmatprep.subr.mxu0 0.0
    %80 = vmatpush1.msra.mxu0 0.0
    %81 = vmatprep.subr.mxu0 0.0
    %82 = vmatpush1.msra.mxu0 0.0
    %83 = vmatprep.subr.mxu0 0.0
    %84 = vmatpush1.msra.mxu0 0.0
    %85 = vmatprep.subr.mxu0 0.0
    %86 = vmatpush1.msra.mxu0 0.0
    %87 = vmatprep.subr.mxu0 0.0
    %88 = vmatpush1.msra.mxu0 0.0
    %89 = vmatprep.subr.mxu0 0.0
    %90 = vmatpush1.msra.mxu0 0.0
    %91 = vmatprep.subr.mxu0 0.0
    %92 = vmatpush1.msra.mxu0 0.0
    %93 = vmatprep.subr.mxu0 0.0
    %94 = vmatpush1.msra.mxu0 0.0
    %95 = vmatprep.subr.mxu0 0.0
    %96 = vmatpush1.msra.mxu0 0.0
    %97 = vmatprep.subr.mxu0 0.0
    %98 = vmatpush1.msra.mxu0 0.0
    %99 = vmatprep.subr.mxu0 0.0
    %100 = vmatpush1.msra.mxu0 0.0
    %101 = vmatprep.subr.mxu0 0.0
    %102 = vmatpush1.msra.mxu0 0.0
    %103 = vmatprep.subr.mxu0 0.0
    %104 = vmatpush1.msra.mxu0 0.0
    %105 = vmatprep.subr.mxu0 0.0
    %106 = vmatpush1.msra.mxu0 0.0
    %107 = vmatprep.subr.mxu0 0.0
    %108 = vmatpush1.msra.mxu0 0.0
    %109 = vmatprep.subr.mxu0 0.0
    %110 = vmatpush1.msra.mxu0 0.0
    %111 = vmatprep.subr.mxu0 0.0
    %112 = vmatpush1.msra.mxu0 0.0
    %113 = vmatprep.subr.mxu0 0.0
    %114 = vmatpush1.msra.mxu0 0.0
    %115 = vmatprep.subr.mxu0 0.0
    %116 = vmatpush1.msra.mxu0 0.0
    %117 = vmatprep.subr.mxu0 0.0
    %118 = vmatpush1.msra.mxu0 0.0
    %119 = vmatprep.subr.mxu0 0.0
    %120 = vmatpush1.msra.mxu0 0.0
    %121 = vmatprep.mubr.f32.mxu0 0.0
    %122 = vmatmul.mubr.f32.gmra.mrb[0].mxu0 %v55
    %v123 = vpop.f32.mrb[0].mxu0
    %v124 = vadd.f32 %v51, %v123
    %v125 = vpop.f32.mrb[0].mxu0
    %126 = vdwg.mxu0
    %vm127 = vcmask 254976
    %128 = vst.msk [vmem:[#allocation7] sm:$0x3] %vm127, %v124
    // Predicated region
    $region22: #{tpu_custom_call.1} parent=1 // pred_check
      _
    $region23: #{tpu_custom_call.1} parent=1 // pred_check_branch
      %130 = sbr.rel (0) target = $region25
    $region24: #{tpu_custom_call.1} parent=1 // pred_region
      %s132 = ssub.s32 32, 32
      %133 = vsyncadd [#allocation4], %s132
      %s135 = sshll.u32 [#allocation7], 4
      %s136 = int_to_ptr.vmem [resolvable:$true] %s135
      %138 = dma.vmem_to_hbm [thread:$0]  %s136, 32, %s3, [#allocation4]
    $region25: #{tpu_custom_call.1} parent=1 // pred_fallthru
      _
    // Predicated region
    $region26: #{tpu_custom_call.1} parent=1 // pred_check
      _
    $region27: #{tpu_custom_call.1} parent=1 // pred_check_branch
      %140 = sbr.rel (0) target = $region29
    $region28: #{tpu_custom_call.1} parent=1 // pred_region
      %141 = dma.done [#allocation4], 32
    $region29: #{tpu_custom_call.1} parent=1 // pred_fallthru
      _
    %142 = vsyncpa [#allocation3], 1
    %143 = vsyncpa [#allocation6], 1
    %144 = vsyncpa [#allocation4], 1

</llo_original>
